<compile_context>
chip_gen: v5e
topology: v5e:2x2
jax: 0.10.0
libtpu: 0.0.40
codegen_flags: <defaults>
</compile_context>

<pallas_src>
import jax
import jax.numpy as jnp
from jax.experimental import pallas as pl
from jax.experimental.pallas import tpu as pltpu

_LANES = 128  # hidden widths padded to one full lane tile


def _round_up(n, m):
    return ((n + m - 1) // m) * m


def _make_kernel(ck, num_chunks):
    """Builds the MLP kernel for a fixed in-tile chunking (ck rows per chunk)."""

    def mlp_kernel(x_ref,
                   w1_ref, b1_ref,
                   w2_ref, b2_ref,
                   w3_ref, b3_ref,
                   w4_ref, b4_ref,
                   o_ref):
        cdt = w1_ref.dtype            # matmul operand dtype (bf16 or f32)
        b1 = b1_ref[...]              # (128, 1) f32, lane-broadcast on add
        b2 = b2_ref[...]
        b3 = b3_ref[...]
        b4 = b4_ref[...]              # (1, 1) f32

        # Deliberate full unroll with static offsets: each chunk's (128, ck)
        # intermediates are dead after its output store, so the working set stays
        # in vregs and every slice start is a compile-time constant.
        for c in range(num_chunks):
            off = c * ck
            x_c = x_ref[off:off + ck, :]                 # (ck, F) f32
            xt = jnp.transpose(x_c).astype(cdt)          # (F, ck) - small transpose
            h = jnp.dot(w1_ref[...], xt,
                        preferred_element_type=jnp.float32) + b1      # (128, ck)
            h = jnp.maximum(h, 0.0).astype(cdt)
            h = jnp.dot(w2_ref[...], h,
                        preferred_element_type=jnp.float32) + b2
            h = jnp.maximum(h, 0.0).astype(cdt)
            h = jnp.dot(w3_ref[...], h,
                        preferred_element_type=jnp.float32) + b3
            h = jnp.maximum(h, 0.0).astype(cdt)
            row = jnp.dot(w4_ref[...], h,
                          preferred_element_type=jnp.float32) + b4    # (1, ck)
            o_ref[:, off:off + ck] = row.astype(o_ref.dtype)          # lane-dense

    return mlp_kernel


def dnn_regressor_forward(x, params, *, tb=4096, use_bf16=True):
    """x: (B, input_size) float32. params: w{l} as (in,out), b{l} as (1,out)."""
    B, F = x.shape

    # ---- batch tile size ----------------------------------------------------
    padded_b = _round_up(B, _LANES)
    tb = max(_LANES, min(_round_up(tb, _LANES), padded_b))
    # v7x has 2 TensorCores: make sure the "parallel" grid has >= 2 tiles whenever
    # the batch is big enough to split (near-free on single-TC v5e/v6e).
    while padded_b > _LANES and pl.cdiv(padded_b, tb) < 2 and tb > _LANES:
        tb = _round_up(tb // 2, _LANES)

    if B < tb:
        # Only a small single-tile batch gets padded (negligible copy). Larger
        # batches are never padded: the ragged last tile relies on boundary-block
        # semantics (garbage tail rows land in output lanes >= B, sliced below).
        x = jnp.pad(x, ((0, tb - B), (0, 0)))
    num_tiles = pl.cdiv(x.shape[0], tb)

    # In-tile chunk size: keeps per-chunk intermediates at (128, ck).
    ck = 256 if tb % 256 == 0 else _LANES
    num_chunks = tb // ck

    # ---- weights: transposed to (out, in), zero-padded to 128 output lanes ----
    def pad_to(a, rows, cols):
        return jnp.pad(a, ((0, rows - a.shape[0]), (0, cols - a.shape[1])))

    w1 = pad_to(params["w1"].T, _LANES, F)        # (128, F)
    w2 = pad_to(params["w2"].T, _LANES, _LANES)   # (128, 128)
    w3 = pad_to(params["w3"].T, _LANES, _LANES)   # (128, 128)
    w4 = pad_to(params["w4"].T, 1, _LANES)        # (1, 128)
    b1 = pad_to(params["b1"].T, _LANES, 1)        # (128, 1)
    b2 = pad_to(params["b2"].T, _LANES, 1)
    b3 = pad_to(params["b3"].T, _LANES, 1)
    b4 = params["b4"]                             # (1, 1)
    if use_bf16:
        # bf16 operands + f32 accumulation -> single-pass MXU matmuls.
        w1, w2, w3, w4 = (w.astype(jnp.bfloat16) for w in (w1, w2, w3, w4))

    # Constant-index full blocks: fetched once, resident across grid steps.
    def full(a):
        return pl.BlockSpec(a.shape, lambda i: (0, 0))

    out = pl.pallas_call(
        _make_kernel(ck, num_chunks),
        out_shape=jax.ShapeDtypeStruct((1, num_tiles * tb), jnp.float32),
        grid_spec=pltpu.PrefetchScalarGridSpec(
            num_scalar_prefetch=0,
            grid=(num_tiles,),
            in_specs=[
                pl.BlockSpec((tb, F), lambda i: (i, 0)),   # streamed x tile
                full(w1), full(b1),
                full(w2), full(b2),
                full(w3), full(b3),
                full(w4), full(b4),
            ],
            out_specs=pl.BlockSpec((1, tb), lambda i: (0, i)),
        ),
        compiler_params=pltpu.CompilerParams(
            dimension_semantics=("parallel",)),   # shards tiles over v7x's 2 TCs
    )(x, w1, b1, w2, b2, w3, b3, w4, b4)

    return out.reshape(-1)[:B].reshape(B, 1)


def init_params(key, input_size):
    """Deterministic init mimicking nn.Linear default (uniform +/- 1/sqrt(fan_in))."""
    sizes = [(input_size, 44), (44, 22), (22, 11), (11, 1)]
    params = {}
    for idx, (fan_in, fan_out) in enumerate(sizes, start=1):
        key, kw, kb = jax.random.split(key, 3)
        bound = 1.0 / jnp.sqrt(jnp.float32(fan_in))
        params[f"w{idx}"] = jax.random.uniform(
            kw, (fan_in, fan_out), jnp.float32, -bound, bound)
        params[f"b{idx}"] = jax.random.uniform(
            kb, (1, fan_out), jnp.float32, -bound, bound)
    return params


def reference_forward(x, params):
    hp = jax.lax.Precision.HIGHEST
    h = jnp.maximum(jnp.dot(x, params["w1"], precision=hp) + params["b1"], 0.0)
    h = jnp.maximum(jnp.dot(h, params["w2"], precision=hp) + params["b2"], 0.0)
    h = jnp.maximum(jnp.dot(h, params["w3"], precision=hp) + params["b3"], 0.0)
    return jnp.dot(h, params["w4"], precision=hp) + params["b4"]


if __name__ == "__main__":
    key = jax.random.PRNGKey(0)
    input_size = 32

    key, kp = jax.random.split(key)
    params = init_params(kp, input_size)

    # Small batch: exercises the single (padded) tile path.
    key, kx = jax.random.split(key)
    x_small = jax.random.normal(kx, (8, input_size), jnp.float32)
    y_ref_small = reference_forward(x_small, params)

    y_f32 = jax.block_until_ready(
        dnn_regressor_forward(x_small, params, use_bf16=False))
    assert y_f32.shape == (8, 1)
    assert jnp.allclose(y_f32, y_ref_small, atol=3e-3, rtol=3e-3)

    y_bf16 = jax.block_until_ready(dnn_regressor_forward(x_small, params))
    assert y_bf16.shape == (8, 1)
    assert jnp.allclose(y_bf16, y_ref_small, atol=3e-2, rtol=3e-2)

    # Larger batch: multi-tile grid with a ragged last tile (no wrapper-side pad).
    key, kx = jax.random.split(key)
    x_big = jax.random.normal(kx, (1000, input_size), jnp.float32)
    y_ref_big = reference_forward(x_big, params)

    y_big = jax.block_until_ready(
        dnn_regressor_forward(x_big, params, tb=512))          # bf16 fast path
    assert y_big.shape == (1000, 1)
    assert jnp.allclose(y_big, y_ref_big, atol=3e-2, rtol=3e-2)

    y_big_f32 = jax.block_until_ready(
        dnn_regressor_forward(x_big, params, tb=256, use_bf16=False))
    assert y_big_f32.shape == (1000, 1)
    assert jnp.allclose(y_big_f32, y_ref_big, atol=3e-3, rtol=3e-3)

    print("KERNEL_OK")
</pallas_src>

<mosaic_0001>
module attributes {stable_mosaic.version = 11 : i64} {
  func.func @mlp_kernel(%arg0: i32, %arg1: memref<128x32xf32, #tpu.memory_space<vmem>>, %arg2: memref<128x32xf32, #tpu.memory_space<vmem>>, %arg3: memref<128x1xf32, #tpu.memory_space<vmem>>, %arg4: memref<128x128xf32, #tpu.memory_space<vmem>>, %arg5: memref<128x1xf32, #tpu.memory_space<vmem>>, %arg6: memref<128x128xf32, #tpu.memory_space<vmem>>, %arg7: memref<128x1xf32, #tpu.memory_space<vmem>>, %arg8: memref<1x128xf32, #tpu.memory_space<vmem>>, %arg9: memref<1x1xf32, #tpu.memory_space<vmem>>, %arg10: memref<1x128xf32, #tpu.memory_space<vmem>>) attributes {dimension_semantics = [#tpu.dimension_semantics<parallel>], iteration_bounds = array<i64: 1>, scalar_prefetch = 0 : i64, scratch_operands = 0 : i64, tpu.core_type = #tpu.core_type<tc>, window_params = [{transform_indices = @transform_0, window_bounds = array<i64: 128, 32>}, {pipeline_mode = #tpu.pipeline_mode<synchronous>, transform_indices = @transform_1, window_bounds = array<i64: 128, 32>}, {pipeline_mode = #tpu.pipeline_mode<synchronous>, transform_indices = @transform_2, window_bounds = array<i64: 128, 1>}, {pipeline_mode = #tpu.pipeline_mode<synchronous>, transform_indices = @transform_3, window_bounds = array<i64: 128, 128>}, {pipeline_mode = #tpu.pipeline_mode<synchronous>, transform_indices = @transform_4, window_bounds = array<i64: 128, 1>}, {pipeline_mode = #tpu.pipeline_mode<synchronous>, transform_indices = @transform_5, window_bounds = array<i64: 128, 128>}, {pipeline_mode = #tpu.pipeline_mode<synchronous>, transform_indices = @transform_6, window_bounds = array<i64: 128, 1>}, {pipeline_mode = #tpu.pipeline_mode<synchronous>, transform_indices = @transform_7, window_bounds = array<i64: 1, 128>}, {pipeline_mode = #tpu.pipeline_mode<synchronous>, transform_indices = @transform_8, window_bounds = array<i64: 1, 1>}, {transform_indices = @transform_9, window_bounds = array<i64: 1, 128>}]} {
    %c0 = arith.constant 0 : index
    %c0_0 = arith.constant 0 : index
    %0 = vector.load %arg3[%c0, %c0_0] : memref<128x1xf32, #tpu.memory_space<vmem>>, vector<128x1xf32>
    %c0_1 = arith.constant 0 : index
    %c0_2 = arith.constant 0 : index
    %1 = vector.load %arg5[%c0_1, %c0_2] : memref<128x1xf32, #tpu.memory_space<vmem>>, vector<128x1xf32>
    %c0_3 = arith.constant 0 : index
    %c0_4 = arith.constant 0 : index
    %2 = vector.load %arg7[%c0_3, %c0_4] : memref<128x1xf32, #tpu.memory_space<vmem>>, vector<128x1xf32>
    %c0_5 = arith.constant 0 : index
    %c0_6 = arith.constant 0 : index
    %3 = vector.load %arg9[%c0_5, %c0_6] : memref<1x1xf32, #tpu.memory_space<vmem>>, vector<1x1xf32>
    %c0_7 = arith.constant 0 : index
    %c0_8 = arith.constant 0 : index
    %4 = vector.load %arg1[%c0_7, %c0_8] : memref<128x32xf32, #tpu.memory_space<vmem>>, vector<128x32xf32>
    %5 = tpu.transpose %4, [1, 0] : vector<128x32xf32> -> vector<32x128xf32>
    %c0_9 = arith.constant 0 : index
    %c0_10 = arith.constant 0 : index
    %6 = vector.load %arg2[%c0_9, %c0_10] : memref<128x32xf32, #tpu.memory_space<vmem>>, vector<128x32xf32>
    %cst = arith.constant dense<0.000000e+00> : vector<128x128xf32>
    %7 = tpu.matmul %6, %5, %cst {dimension_numbers = #tpu.dot_dimension_numbers<[1], [0], [0], [1], [0, 0, 1, 1], [], []>} : vector<128x32xf32>, vector<32x128xf32>, vector<128x128xf32> -> vector<128x128xf32>
    %8 = vector.broadcast %0 : vector<128x1xf32> to vector<128x128xf32>
    %9 = arith.addf %7, %8 : vector<128x128xf32>
    %cst_11 = arith.constant 0.000000e+00 : f32
    %10 = vector.broadcast %cst_11 : f32 to vector<128x128xf32>
    %11 = arith.maximumf %9, %10 : vector<128x128xf32>
    %c0_12 = arith.constant 0 : index
    %c0_13 = arith.constant 0 : index
    %12 = vector.load %arg4[%c0_12, %c0_13] : memref<128x128xf32, #tpu.memory_space<vmem>>, vector<128x128xf32>
    %cst_14 = arith.constant dense<0.000000e+00> : vector<128x128xf32>
    %13 = tpu.matmul %12, %11, %cst_14 {dimension_numbers = #tpu.dot_dimension_numbers<[1], [0], [0], [1], [0, 0, 1, 1], [], []>} : vector<128x128xf32>, vector<128x128xf32>, vector<128x128xf32> -> vector<128x128xf32>
    %14 = vector.broadcast %1 : vector<128x1xf32> to vector<128x128xf32>
    %15 = arith.addf %13, %14 : vector<128x128xf32>
    %cst_15 = arith.constant 0.000000e+00 : f32
    %16 = vector.broadcast %cst_15 : f32 to vector<128x128xf32>
    %17 = arith.maximumf %15, %16 : vector<128x128xf32>
    %c0_16 = arith.constant 0 : index
    %c0_17 = arith.constant 0 : index
    %18 = vector.load %arg6[%c0_16, %c0_17] : memref<128x128xf32, #tpu.memory_space<vmem>>, vector<128x128xf32>
    %cst_18 = arith.constant dense<0.000000e+00> : vector<128x128xf32>
    %19 = tpu.matmul %18, %17, %cst_18 {dimension_numbers = #tpu.dot_dimension_numbers<[1], [0], [0], [1], [0, 0, 1, 1], [], []>} : vector<128x128xf32>, vector<128x128xf32>, vector<128x128xf32> -> vector<128x128xf32>
    %20 = vector.broadcast %2 : vector<128x1xf32> to vector<128x128xf32>
    %21 = arith.addf %19, %20 : vector<128x128xf32>
    %cst_19 = arith.constant 0.000000e+00 : f32
    %22 = vector.broadcast %cst_19 : f32 to vector<128x128xf32>
    %23 = arith.maximumf %21, %22 : vector<128x128xf32>
    %c0_20 = arith.constant 0 : index
    %c0_21 = arith.constant 0 : index
    %24 = vector.load %arg8[%c0_20, %c0_21] : memref<1x128xf32, #tpu.memory_space<vmem>>, vector<1x128xf32>
    %cst_22 = arith.constant dense<0.000000e+00> : vector<1x128xf32>
    %25 = tpu.matmul %24, %23, %cst_22 {dimension_numbers = #tpu.dot_dimension_numbers<[1], [0], [0], [1], [0, 0, 1, 1], [], []>} : vector<1x128xf32>, vector<128x128xf32>, vector<1x128xf32> -> vector<1x128xf32>
    %26 = vector.broadcast %3 : vector<1x1xf32> to vector<1x128xf32>
    %27 = arith.addf %25, %26 : vector<1x128xf32>
    %c0_23 = arith.constant 0 : index
    %c0_24 = arith.constant 0 : index
    %28 = vector.load %arg10[%c0_23, %c0_24] : memref<1x128xf32, #tpu.memory_space<vmem>>, vector<1x128xf32>
    tpu.vector_store %arg10[%c0_23, %c0_24], %27 {strides = array<i32>} : memref<1x128xf32, #tpu.memory_space<vmem>>, vector<1x128xf32>,
    return
  }
  func.func @transform_0(%arg0: i32) -> (i32, i32) {
    %c0_i32 = arith.constant 0 : i32
    %c0_i32_0 = arith.constant 0 : i32
    return %arg0, %c0_i32 : i32, i32
  }
  func.func @transform_1(%arg0: i32) -> (i32, i32) {
    %c0_i32 = arith.constant 0 : i32
    %c0_i32_0 = arith.constant 0 : i32
    %c0_i32_1 = arith.constant 0 : i32
    return %c0_i32, %c0_i32_0 : i32, i32
  }
  func.func @transform_2(%arg0: i32) -> (i32, i32) {
    %c0_i32 = arith.constant 0 : i32
    %c0_i32_0 = arith.constant 0 : i32
    %c0_i32_1 = arith.constant 0 : i32
    return %c0_i32, %c0_i32_0 : i32, i32
  }
  func.func @transform_3(%arg0: i32) -> (i32, i32) {
    %c0_i32 = arith.constant 0 : i32
    %c0_i32_0 = arith.constant 0 : i32
    %c0_i32_1 = arith.constant 0 : i32
    return %c0_i32, %c0_i32_0 : i32, i32
  }
  func.func @transform_4(%arg0: i32) -> (i32, i32) {
    %c0_i32 = arith.constant 0 : i32
    %c0_i32_0 = arith.constant 0 : i32
    %c0_i32_1 = arith.constant 0 : i32
    return %c0_i32, %c0_i32_0 : i32, i32
  }
  func.func @transform_5(%arg0: i32) -> (i32, i32) {
    %c0_i32 = arith.constant 0 : i32
    %c0_i32_0 = arith.constant 0 : i32
    %c0_i32_1 = arith.constant 0 : i32
    return %c0_i32, %c0_i32_0 : i32, i32
  }
  func.func @transform_6(%arg0: i32) -> (i32, i32) {
    %c0_i32 = arith.constant 0 : i32
    %c0_i32_0 = arith.constant 0 : i32
    %c0_i32_1 = arith.constant 0 : i32
    return %c0_i32, %c0_i32_0 : i32, i32
  }
  func.func @transform_7(%arg0: i32) -> (i32, i32) {
    %c0_i32 = arith.constant 0 : i32
    %c0_i32_0 = arith.constant 0 : i32
    %c0_i32_1 = arith.constant 0 : i32
    return %c0_i32, %c0_i32_0 : i32, i32
  }
  func.func @transform_8(%arg0: i32) -> (i32, i32) {
    %c0_i32 = arith.constant 0 : i32
    %c0_i32_0 = arith.constant 0 : i32
    %c0_i32_1 = arith.constant 0 : i32
    return %c0_i32, %c0_i32_0 : i32, i32
  }
  func.func @transform_9(%arg0: i32) -> (i32, i32) {
    %c0_i32 = arith.constant 0 : i32
    %c0_i32_0 = arith.constant 0 : i32
    return %c0_i32, %arg0 : i32, i32
  }
}

</mosaic_0001>

<llo_original>
// kernel: tpu_custom_call.1
$region0: #{tpu_custom_call.1}
  #allocation0 [shape = 'u32[]', space=smem, size = 0x4, offset = 0x4, fixed_abs, tag = 'smem constant byte address 0x4 - core index']
  #allocation1 [shape = 'u32[72,128]{1,0:T(1,128)}', space=vmem, size = 0x9000, scoped, tag = 'internal scratch']
  #allocation2 [shape = 'f32[1,1]{1,0:T(1,128)S(1)}', space=vmem, size = 0x200, scoped, tag = 'scoped memory for tpu_custom_call.1']
  %s0 = inlined_call_operand.vmem [shape: f32[128,32], index: 0, kind: input, shape index: {}]
  %s1 = inlined_call_operand.vmem [shape: f32[128,32], index: 1, kind: input, shape index: {}]
  %s2 = inlined_call_operand.vmem [shape: f32[128,1], index: 2, kind: input, shape index: {}]
  %s3 = inlined_call_operand.vmem [shape: f32[128,128], index: 3, kind: input, shape index: {}]
  %s4 = inlined_call_operand.vmem [shape: f32[128,1], index: 4, kind: input, shape index: {}]
  %s5 = inlined_call_operand.vmem [shape: f32[128,128], index: 5, kind: input, shape index: {}]
  %s6 = inlined_call_operand.vmem [shape: f32[128,1], index: 6, kind: input, shape index: {}]
  %s7 = inlined_call_operand.vmem [shape: f32[1,128], index: 7, kind: input, shape index: {}]
  %s8 = inlined_call_operand.<no memory space> [shape: f32[1,1], index: 8, kind: input, shape index: {}]
  %s9 = inlined_call_operand.hbm [shape: f32[1,128], index: 9, kind: output, shape index: {}]
  %s10 = sld [smem:[#allocation0]]
  $region46: #{tpu_custom_call.1} parent=0
    _
  %s12 = ssub.s32 1, %s10
  %s13 = scalar_select 0, %s12, %s10
  %v14 = vstv %s8
  %15 = vst [vmem:[#allocation2] sm:$0x1] %v14
  $region1: #{tpu_custom_call.1} parent=0
    #allocation3 [shape = 'u8[512]{0}', space=vmem, size = 0x400, scoped, tag = 'output window, operand 0, single buffered']
    #allocation4 [shape = 's32[1]{0}', space=sflag, size = 0x4, scoped, tag = 'scoped memory for tpu_custom_call.1']
    %16 = vsyncpa [#allocation4], 0
    // Predicated region
    $region2: #{tpu_custom_call.1} parent=1 // pred_check
      _
    $region3: #{tpu_custom_call.1} parent=1 // pred_check_branch
      %18 = sbr.rel (0) target = $region5
    $region4: #{tpu_custom_call.1} parent=1 // pred_region
      _
    $region5: #{tpu_custom_call.1} parent=1 // pred_fallthru
      _
    // Predicated region
    $region6: #{tpu_custom_call.1} parent=1 // pred_check
      _
    $region7: #{tpu_custom_call.1} parent=1 // pred_check_branch
      %20 = sbr.rel (0) target = $region9
    $region8: #{tpu_custom_call.1} parent=1 // pred_region
      _
    $region9: #{tpu_custom_call.1} parent=1 // pred_fallthru
      _
    // Predicated region
    $region10: #{tpu_custom_call.1} parent=1 // pred_check
      _
    $region11: #{tpu_custom_call.1} parent=1 // pred_check_branch
      %22 = sbr.rel (0) target = $region13
    $region12: #{tpu_custom_call.1} parent=1 // pred_region
      _
    $region13: #{tpu_custom_call.1} parent=1 // pred_fallthru
      _
    // Predicated region
    $region14: #{tpu_custom_call.1} parent=1 // pred_check
      _
    $region15: #{tpu_custom_call.1} parent=1 // pred_check_branch
      %24 = sbr.rel (0) target = $region17
    $region16: #{tpu_custom_call.1} parent=1 // pred_region
      _
    $region17: #{tpu_custom_call.1} parent=1 // pred_fallthru
      _
    // Predicated region
    $region18: #{tpu_custom_call.1} parent=1 // pred_check
      _
    $region19: #{tpu_custom_call.1} parent=1 // pred_check_branch
      %26 = sbr.rel (0) target = $region21
    $region20: #{tpu_custom_call.1} parent=1 // pred_region
      _
    $region21: #{tpu_custom_call.1} parent=1 // pred_fallthru
      _
    // Predicated region
    $region22: #{tpu_custom_call.1} parent=1 // pred_check
      _
    $region23: #{tpu_custom_call.1} parent=1 // pred_check_branch
      %28 = sbr.rel (0) target = $region25
    $region24: #{tpu_custom_call.1} parent=1 // pred_region
      _
    $region25: #{tpu_custom_call.1} parent=1 // pred_fallthru
      _
    // Predicated region
    $region26: #{tpu_custom_call.1} parent=1 // pred_check
      _
    $region27: #{tpu_custom_call.1} parent=1 // pred_check_branch
      %30 = sbr.rel (0) target = $region29
    $region28: #{tpu_custom_call.1} parent=1 // pred_region
      _
    $region29: #{tpu_custom_call.1} parent=1 // pred_fallthru
      _
    // Predicated region
    $region30: #{tpu_custom_call.1} parent=1 // pred_check
      _
    $region31: #{tpu_custom_call.1} parent=1 // pred_check_branch
      %32 = sbr.rel (0) target = $region33
    $region32: #{tpu_custom_call.1} parent=1 // pred_region
      _
    $region33: #{tpu_custom_call.1} parent=1 // pred_fallthru
      _
    // Predicated region
    $region34: #{tpu_custom_call.1} parent=1 // pred_check
      _
    $region35: #{tpu_custom_call.1} parent=1 // pred_check_branch
      %34 = sbr.rel (0) target = $region37
    $region36: #{tpu_custom_call.1} parent=1 // pred_region
      _
    $region37: #{tpu_custom_call.1} parent=1 // pred_fallthru
      _
    %v35 = vld [vmem:[%s2] sm:$0xff]
    %v36 = vld [vmem:[%s2 + $0x8] sm:$0xff]
    %v37 = vld [vmem:[%s2 + $0x10] sm:$0xff]
    %v38 = vld [vmem:[%s2 + $0x18] sm:$0xff]
    %v39 = vld [vmem:[%s2 + $0x20] sm:$0xff]
    %v40 = vld [vmem:[%s2 + $0x28] sm:$0xff]
    %v41 = vld [vmem:[%s2 + $0x30] sm:$0xff]
    %v42 = vld [vmem:[%s2 + $0x38] sm:$0xff]
    %v43 = vld [vmem:[%s2 + $0x40] sm:$0xff]
    %v44 = vld [vmem:[%s2 + $0x48] sm:$0xff]
    %v45 = vld [vmem:[%s2 + $0x50] sm:$0xff]
    %v46 = vld [vmem:[%s2 + $0x58] sm:$0xff]
    %v47 = vld [vmem:[%s2 + $0x60] sm:$0xff]
    %v48 = vld [vmem:[%s2 + $0x68] sm:$0xff]
    %v49 = vld [vmem:[%s2 + $0x70] sm:$0xff]
    %v50 = vld [vmem:[%s2 + $0x78] sm:$0xff]
    %v51 = vld [vmem:[%s4] sm:$0xff]
    %v52 = vld [vmem:[%s4 + $0x8] sm:$0xff]
    %v53 = vld [vmem:[%s4 + $0x10] sm:$0xff]
    %v54 = vld [vmem:[%s4 + $0x18] sm:$0xff]
    %v55 = vld [vmem:[%s4 + $0x20] sm:$0xff]
    %v56 = vld [vmem:[%s4 + $0x28] sm:$0xff]
    %v57 = vld [vmem:[%s4 + $0x30] sm:$0xff]
    %v58 = vld [vmem:[%s4 + $0x38] sm:$0xff]
    %v59 = vld [vmem:[%s4 + $0x40] sm:$0xff]
    %v60 = vld [vmem:[%s4 + $0x48] sm:$0xff]
    %v61 = vld [vmem:[%s4 + $0x50] sm:$0xff]
    %v62 = vld [vmem:[%s4 + $0x58] sm:$0xff]
    %v63 = vld [vmem:[%s4 + $0x60] sm:$0xff]
    %v64 = vld [vmem:[%s4 + $0x68] sm:$0xff]
    %v65 = vld [vmem:[%s4 + $0x70] sm:$0xff]
    %v66 = vld [vmem:[%s4 + $0x78] sm:$0xff]
    %v67 = vld [vmem:[%s6] sm:$0xff]
    %v68 = vld [vmem:[%s6 + $0x8] sm:$0xff]
    %v69 = vld [vmem:[%s6 + $0x10] sm:$0xff]
    %v70 = vld [vmem:[%s6 + $0x18] sm:$0xff]
    %v71 = vld [vmem:[%s6 + $0x20] sm:$0xff]
    %v72 = vld [vmem:[%s6 + $0x28] sm:$0xff]
    %v73 = vld [vmem:[%s6 + $0x30] sm:$0xff]
    %v74 = vld [vmem:[%s6 + $0x38] sm:$0xff]
    %v75 = vld [vmem:[%s6 + $0x40] sm:$0xff]
    %v76 = vld [vmem:[%s6 + $0x48] sm:$0xff]
    %v77 = vld [vmem:[%s6 + $0x50] sm:$0xff]
    %v78 = vld [vmem:[%s6 + $0x58] sm:$0xff]
    %v79 = vld [vmem:[%s6 + $0x60] sm:$0xff]
    %v80 = vld [vmem:[%s6 + $0x68] sm:$0xff]
    %v81 = vld [vmem:[%s6 + $0x70] sm:$0xff]
    %v82 = vld [vmem:[%s6 + $0x78] sm:$0xff]
    %v83 = vld [vmem:[#allocation2] sm:$0x1]
    %v84 = vld [vmem:[%s0] sm:$0xff]
    %v85 = vld [vmem:[%s0 + $0x8] sm:$0xff]
    %v86 = vld [vmem:[%s0 + $0x10] sm:$0xff]
    %v87 = vld [vmem:[%s0 + $0x18] sm:$0xff]
    %v88 = vld [vmem:[%s0 + $0x20] sm:$0xff]
    %v89 = vld [vmem:[%s0 + $0x28] sm:$0xff]
    %v90 = vld [vmem:[%s0 + $0x30] sm:$0xff]
    %v91 = vld [vmem:[%s0 + $0x38] sm:$0xff]
    %v92 = vld [vmem:[%s0 + $0x40] sm:$0xff]
    %v93 = vld [vmem:[%s0 + $0x48] sm:$0xff]
    %v94 = vld [vmem:[%s0 + $0x50] sm:$0xff]
    %v95 = vld [vmem:[%s0 + $0x58] sm:$0xff]
    %v96 = vld [vmem:[%s0 + $0x60] sm:$0xff]
    %v97 = vld [vmem:[%s0 + $0x68] sm:$0xff]
    %v98 = vld [vmem:[%s0 + $0x70] sm:$0xff]
    %v99 = vld [vmem:[%s0 + $0x78] sm:$0xff]
    %v100 = vld [vmem:[%s1] sm:$0xff]
    %v101 = vld [vmem:[%s1 + $0x8] sm:$0xff]
    %v102 = vld [vmem:[%s1 + $0x10] sm:$0xff]
    %v103 = vld [vmem:[%s1 + $0x18] sm:$0xff]
    %v104 = vld [vmem:[%s1 + $0x20] sm:$0xff]
    %v105 = vld [vmem:[%s1 + $0x28] sm:$0xff]
    %v106 = vld [vmem:[%s1 + $0x30] sm:$0xff]
    %v107 = vld [vmem:[%s1 + $0x38] sm:$0xff]
    %v108 = vld [vmem:[%s1 + $0x40] sm:$0xff]
    %v109 = vld [vmem:[%s1 + $0x48] sm:$0xff]
    %v110 = vld [vmem:[%s1 + $0x50] sm:$0xff]
    %v111 = vld [vmem:[%s1 + $0x58] sm:$0xff]
    %v112 = vld [vmem:[%s1 + $0x60] sm:$0xff]
    %v113 = vld [vmem:[%s1 + $0x68] sm:$0xff]
    %v114 = vld [vmem:[%s1 + $0x70] sm:$0xff]
    %v115 = vld [vmem:[%s1 + $0x78] sm:$0xff]
    %117 = vset.pattern.permute.xlu0 0
    %118 = vperm.xlu0 %117, %v35
    %v119 = vpop.permute.xlu0 %118
    %122 = vset.pattern.permute.xlu0 0
    %123 = vperm.xlu0 %122, %v36
    %v124 = vpop.permute.xlu0 %123
    %127 = vset.pattern.permute.xlu0 0
    %128 = vperm.xlu0 %127, %v37
    %v129 = vpop.permute.xlu0 %128
    %132 = vset.pattern.permute.xlu0 0
    %133 = vperm.xlu0 %132, %v38
    %v134 = vpop.permute.xlu0 %133
    %137 = vset.pattern.permute.xlu0 0
    %138 = vperm.xlu0 %137, %v39
    %v139 = vpop.permute.xlu0 %138
    %142 = vset.pattern.permute.xlu0 0
    %143 = vperm.xlu0 %142, %v40
    %v144 = vpop.permute.xlu0 %143
    %147 = vset.pattern.permute.xlu0 0
    %148 = vperm.xlu0 %147, %v41
    %v149 = vpop.permute.xlu0 %148
    %152 = vset.pattern.permute.xlu0 0
    %153 = vperm.xlu0 %152, %v42
    %v154 = vpop.permute.xlu0 %153
    %157 = vset.pattern.permute.xlu0 0
    %158 = vperm.xlu0 %157, %v43
    %v159 = vpop.permute.xlu0 %158
    %162 = vset.pattern.permute.xlu0 0
    %163 = vperm.xlu0 %162, %v44
    %v164 = vpop.permute.xlu0 %163
    %167 = vset.pattern.permute.xlu0 0
    %168 = vperm.xlu0 %167, %v45
    %v169 = vpop.permute.xlu0 %168
    %172 = vset.pattern.permute.xlu0 0
    %173 = vperm.xlu0 %172, %v46
    %v174 = vpop.permute.xlu0 %173
    %177 = vset.pattern.permute.xlu0 0
    %178 = vperm.xlu0 %177, %v47
    %v179 = vpop.permute.xlu0 %178
    %182 = vset.pattern.permute.xlu0 0
    %183 = vperm.xlu0 %182, %v48
    %v184 = vpop.permute.xlu0 %183
    %187 = vset.pattern.permute.xlu0 0
    %188 = vperm.xlu0 %187, %v49
    %v189 = vpop.permute.xlu0 %188
    %192 = vset.pattern.permute.xlu0 0
    %193 = vperm.xlu0 %192, %v50
    %v194 = vpop.permute.xlu0 %193
    %vm196 = vcmask 261120
    %v198 = vsel %vm196, %v100, 0
    %v201 = vsel %vm196, %v101, 0
    %v204 = vsel %vm196, %v102, 0
    %v207 = vsel %vm196, %v103, 0
    %v210 = vsel %vm196, %v104, 0
    %v213 = vsel %vm196, %v105, 0
    %v216 = vsel %vm196, %v106, 0
    %v219 = vsel %vm196, %v107, 0
    %v222 = vsel %vm196, %v108, 0
    %v225 = vsel %vm196, %v109, 0
    %v228 = vsel %vm196, %v110, 0
    %v231 = vsel %vm196, %v111, 0
    %v234 = vsel %vm196, %v112, 0
    %v237 = vsel %vm196, %v113, 0
    %v240 = vsel %vm196, %v114, 0
    %v243 = vsel %vm196, %v115, 0
    %v246 = vsel %vm196, %v84, 0
    %v249 = vsel %vm196, %v85, 0
    %v252 = vsel %vm196, %v86, 0
    %v255 = vsel %vm196, %v87, 0
    %v258 = vsel %vm196, %v88, 0
    %v261 = vsel %vm196, %v89, 0
    %v264 = vsel %vm196, %v90, 0
    %v267 = vsel %vm196, %v91, 0
    %v270 = vsel %vm196, %v92, 0
    %v273 = vsel %vm196, %v93, 0
    %v276 = vsel %vm196, %v94, 0
    %v279 = vsel %vm196, %v95, 0
    %v282 = vsel %vm196, %v96, 0
    %v285 = vsel %vm196, %v97, 0
    %v288 = vsel %vm196, %v98, 0
    %v291 = vsel %vm196, %v99, 0
    %293 = vmatpush.xpose.msra.mxu0 %v291
    %294 = vmatpush.xpose.msra.mxu0 %v288
    %295 = vmatpush.xpose.msra.mxu0 %v285
    %296 = vmatpush.xpose.msra.mxu0 %v282
    %297 = vmatpush.xpose.msra.mxu0 %v279
    %298 = vmatpush.xpose.msra.mxu0 %v276
    %299 = vmatpush.xpose.msra.mxu0 %v273
    %300 = vmatpush.xpose.msra.mxu0 %v270
    %301 = vmatpush.xpose.msra.mxu0 %v267
    %302 = vmatpush.xpose.msra.mxu0 %v264
    %303 = vmatpush.xpose.msra.mxu0 %v261
    %304 = vmatpush.xpose.msra.mxu0 %v258
    %305 = vmatpush.xpose.msra.mxu0 %v255
    %306 = vmatpush.xpose.msra.mxu0 %v252
    %307 = vmatpush.xpose.msra.mxu0 %v249
    %308 = vmatpush.xpose.msra.mxu0 %v246
    %309 = vmatmul.f32.gmra.mxu0 %v198
    %v310 = vpop.f32.mrf.mxu0
    %v311 = vadd.f32 %v119, %v310
    %312 = vmatmul.f32.gmra.mxu0 %v201
    %v313 = vpop.f32.mrf.mxu0
    %v314 = vadd.f32 %v124, %v313
    %315 = vmatmul.f32.gmra.mxu0 %v204
    %v316 = vpop.f32.mrf.mxu0
    %v317 = vadd.f32 %v129, %v316
    %318 = vmatmul.f32.gmra.mxu0 %v207
    %v319 = vpop.f32.mrf.mxu0
    %v320 = vadd.f32 %v134, %v319
    %321 = vmatmul.f32.gmra.mxu0 %v210
    %v322 = vpop.f32.mrf.mxu0
    %v323 = vadd.f32 %v139, %v322
    %324 = vmatmul.f32.gmra.mxu0 %v213
    %v325 = vpop.f32.mrf.mxu0
    %v326 = vadd.f32 %v144, %v325
    %327 = vmatmul.f32.gmra.mxu0 %v216
    %v328 = vpop.f32.mrf.mxu0
    %v329 = vadd.f32 %v149, %v328
    %330 = vmatmul.f32.gmra.mxu0 %v219
    %v331 = vpop.f32.mrf.mxu0
    %v332 = vadd.f32 %v154, %v331
    %333 = vmatmul.f32.gmra.mxu0 %v222
    %v334 = vpop.f32.mrf.mxu0
    %v335 = vadd.f32 %v159, %v334
    %336 = vmatmul.f32.gmra.mxu0 %v225
    %v337 = vpop.f32.mrf.mxu0
    %v338 = vadd.f32 %v164, %v337
    %339 = vmatmul.f32.gmra.mxu0 %v228
    %v340 = vpop.f32.mrf.mxu0
    %v341 = vadd.f32 %v169, %v340
    %342 = vmatmul.f32.gmra.mxu0 %v231
    %v343 = vpop.f32.mrf.mxu0
    %v344 = vadd.f32 %v174, %v343
    %345 = vmatmul.f32.gmra.mxu0 %v234
    %v346 = vpop.f32.mrf.mxu0
    %v347 = vadd.f32 %v179, %v346
    %348 = vmatmul.f32.gmra.mxu0 %v237
    %v349 = vpop.f32.mrf.mxu0
    %v350 = vadd.f32 %v184, %v349
    %351 = vmatmul.f32.gmra.mxu0 %v240
    %v352 = vpop.f32.mrf.mxu0
    %v353 = vadd.f32 %v189, %v352
    %354 = vmatmul.f32.gmra.mxu0 %v243
    %v355 = vpop.f32.mrf.mxu0
    %v356 = vadd.f32 %v194, %v355
    %357 = vdwg.mxu0
    %v358 = vmax.f32 %v311, 0.0
    %v359 = vmax.f32 %v314, 0.0
    %v360 = vmax.f32 %v317, 0.0
    %v361 = vmax.f32 %v320, 0.0
    %v362 = vmax.f32 %v323, 0.0
    %v363 = vmax.f32 %v326, 0.0
    %v364 = vmax.f32 %v329, 0.0
    %v365 = vmax.f32 %v332, 0.0
    %v366 = vmax.f32 %v335, 0.0
    %v367 = vmax.f32 %v338, 0.0
    %v368 = vmax.f32 %v341, 0.0
    %v369 = vmax.f32 %v344, 0.0
    %v370 = vmax.f32 %v347, 0.0
    %v371 = vmax.f32 %v350, 0.0
    %v372 = vmax.f32 %v353, 0.0
    %v373 = vmax.f32 %v356, 0.0
    %v374 = vld [vmem:[%s3] sm:$0xff]
    %v375 = vld [vmem:[%s3 + $0x8] sm:$0xff]
    %v376 = vld [vmem:[%s3 + $0x10] sm:$0xff]
    %v377 = vld [vmem:[%s3 + $0x18] sm:$0xff]
    %v378 = vld [vmem:[%s3 + $0x20] sm:$0xff]
    %v379 = vld [vmem:[%s3 + $0x28] sm:$0xff]
    %v380 = vld [vmem:[%s3 + $0x30] sm:$0xff]
    %v381 = vld [vmem:[%s3 + $0x38] sm:$0xff]
    %v382 = vld [vmem:[%s3 + $0x40] sm:$0xff]
    %v383 = vld [vmem:[%s3 + $0x48] sm:$0xff]
    %v384 = vld [vmem:[%s3 + $0x50] sm:$0xff]
    %v385 = vld [vmem:[%s3 + $0x58] sm:$0xff]
    %v386 = vld [vmem:[%s3 + $0x60] sm:$0xff]
    %v387 = vld [vmem:[%s3 + $0x68] sm:$0xff]
    %v388 = vld [vmem:[%s3 + $0x70] sm:$0xff]
    %v389 = vld [vmem:[%s3 + $0x78] sm:$0xff]
    %391 = vset.pattern.permute.xlu0 0
    %392 = vperm.xlu0 %391, %v51
    %v393 = vpop.permute.xlu0 %392
    %396 = vset.pattern.permute.xlu0 0
    %397 = vperm.xlu0 %396, %v52
    %v398 = vpop.permute.xlu0 %397
    %401 = vset.pattern.permute.xlu0 0
    %402 = vperm.xlu0 %401, %v53
    %v403 = vpop.permute.xlu0 %402
    %406 = vset.pattern.permute.xlu0 0
    %407 = vperm.xlu0 %406, %v54
    %v408 = vpop.permute.xlu0 %407
    %411 = vset.pattern.permute.xlu0 0
    %412 = vperm.xlu0 %411, %v55
    %v413 = vpop.permute.xlu0 %412
    %416 = vset.pattern.permute.xlu0 0
    %417 = vperm.xlu0 %416, %v56
    %v418 = vpop.permute.xlu0 %417
    %421 = vset.pattern.permute.xlu0 0
    %422 = vperm.xlu0 %421, %v57
    %v423 = vpop.permute.xlu0 %422
    %426 = vset.pattern.permute.xlu0 0
    %427 = vperm.xlu0 %426, %v58
    %v428 = vpop.permute.xlu0 %427
    %431 = vset.pattern.permute.xlu0 0
    %432 = vperm.xlu0 %431, %v59
    %v433 = vpop.permute.xlu0 %432
    %436 = vset.pattern.permute.xlu0 0
    %437 = vperm.xlu0 %436, %v60
    %v438 = vpop.permute.xlu0 %437
    %441 = vset.pattern.permute.xlu0 0
    %442 = vperm.xlu0 %441, %v61
    %v443 = vpop.permute.xlu0 %442
    %446 = vset.pattern.permute.xlu0 0
    %447 = vperm.xlu0 %446, %v62
    %v448 = vpop.permute.xlu0 %447
    %451 = vset.pattern.permute.xlu0 0
    %452 = vperm.xlu0 %451, %v63
    %v453 = vpop.permute.xlu0 %452
    %456 = vset.pattern.permute.xlu0 0
    %457 = vperm.xlu0 %456, %v64
    %v458 = vpop.permute.xlu0 %457
    %461 = vset.pattern.permute.xlu0 0
    %462 = vperm.xlu0 %461, %v65
    %v463 = vpop.permute.xlu0 %462
    %466 = vset.pattern.permute.xlu0 0
    %467 = vperm.xlu0 %466, %v66
    %v468 = vpop.permute.xlu0 %467
    %470 = vmatpush.msra.mxu0 %v373
    %471 = vmatpush.msra.mxu0 %v372
    %472 = vmatpush.msra.mxu0 %v371
    %473 = vmatpush.msra.mxu0 %v370
    %474 = vmatpush.msra.mxu0 %v369
    %475 = vmatpush.msra.mxu0 %v368
    %476 = vmatpush.msra.mxu0 %v367
    %477 = vmatpush.msra.mxu0 %v366
    %478 = vmatpush.msra.mxu0 %v365
    %479 = vmatpush.msra.mxu0 %v364
    %480 = vmatpush.msra.mxu0 %v363
    %481 = vmatpush.msra.mxu0 %v362
    %482 = vmatpush.msra.mxu0 %v361
    %483 = vmatpush.msra.mxu0 %v360
    %484 = vmatpush.msra.mxu0 %v359
    %485 = vmatpush.msra.mxu0 %v358
    %486 = vmatmul.f32.gmra.mxu0 %v374
    %v487 = vpop.f32.mrf.mxu0
    %v488 = vadd.f32 %v393, %v487
    %489 = vmatmul.f32.gmra.mxu0 %v375
    %v490 = vpop.f32.mrf.mxu0
    %v491 = vadd.f32 %v398, %v490
    %492 = vmatmul.f32.gmra.mxu0 %v376
    %v493 = vpop.f32.mrf.mxu0
    %v494 = vadd.f32 %v403, %v493
    %495 = vmatmul.f32.gmra.mxu0 %v377
    %v496 = vpop.f32.mrf.mxu0
    %v497 = vadd.f32 %v408, %v496
    %498 = vmatmul.f32.gmra.mxu0 %v378
    %v499 = vpop.f32.mrf.mxu0
    %v500 = vadd.f32 %v413, %v499
    %501 = vmatmul.f32.gmra.mxu0 %v379
    %v502 = vpop.f32.mrf.mxu0
    %v503 = vadd.f32 %v418, %v502
    %504 = vmatmul.f32.gmra.mxu0 %v380
    %v505 = vpop.f32.mrf.mxu0
    %v506 = vadd.f32 %v423, %v505
    %507 = vmatmul.f32.gmra.mxu0 %v381
    %v508 = vpop.f32.mrf.mxu0
    %v509 = vadd.f32 %v428, %v508
    %510 = vmatmul.f32.gmra.mxu0 %v382
    %v511 = vpop.f32.mrf.mxu0
    %v512 = vadd.f32 %v433, %v511
    %513 = vmatmul.f32.gmra.mxu0 %v383
    %v514 = vpop.f32.mrf.mxu0
    %v515 = vadd.f32 %v438, %v514
    %516 = vmatmul.f32.gmra.mxu0 %v384
    %v517 = vpop.f32.mrf.mxu0
    %v518 = vadd.f32 %v443, %v517
    %519 = vmatmul.f32.gmra.mxu0 %v385
    %v520 = vpop.f32.mrf.mxu0
    %v521 = vadd.f32 %v448, %v520
    %522 = vmatmul.f32.gmra.mxu0 %v386
    %v523 = vpop.f32.mrf.mxu0
    %v524 = vadd.f32 %v453, %v523
    %525 = vmatmul.f32.gmra.mxu0 %v387
    %v526 = vpop.f32.mrf.mxu0
    %v527 = vadd.f32 %v458, %v526
    %528 = vmatmul.f32.gmra.mxu0 %v388
    %v529 = vpop.f32.mrf.mxu0
    %v530 = vadd.f32 %v463, %v529
    %531 = vmatmul.f32.gmra.mxu0 %v389
    %v532 = vpop.f32.mrf.mxu0
    %v533 = vadd.f32 %v468, %v532
    %534 = vdwg.mxu0
    %v535 = vmax.f32 %v488, 0.0
    %v536 = vmax.f32 %v491, 0.0
    %v537 = vmax.f32 %v494, 0.0
    %v538 = vmax.f32 %v497, 0.0
    %v539 = vmax.f32 %v500, 0.0
    %v540 = vmax.f32 %v503, 0.0
    %v541 = vmax.f32 %v506, 0.0
    %v542 = vmax.f32 %v509, 0.0
    %v543 = vmax.f32 %v512, 0.0
    %v544 = vmax.f32 %v515, 0.0
    %v545 = vmax.f32 %v518, 0.0
    %v546 = vmax.f32 %v521, 0.0
    %v547 = vmax.f32 %v524, 0.0
    %v548 = vmax.f32 %v527, 0.0
    %v549 = vmax.f32 %v530, 0.0
    %v550 = vmax.f32 %v533, 0.0
    %v551 = vld [vmem:[%s5] sm:$0xff]
    %v552 = vld [vmem:[%s5 + $0x8] sm:$0xff]
    %v553 = vld [vmem:[%s5 + $0x10] sm:$0xff]
    %v554 = vld [vmem:[%s5 + $0x18] sm:$0xff]
    %v555 = vld [vmem:[%s5 + $0x20] sm:$0xff]
    %v556 = vld [vmem:[%s5 + $0x28] sm:$0xff]
    %v557 = vld [vmem:[%s5 + $0x30] sm:$0xff]
    %v558 = vld [vmem:[%s5 + $0x38] sm:$0xff]
    %v559 = vld [vmem:[%s5 + $0x40] sm:$0xff]
    %v560 = vld [vmem:[%s5 + $0x48] sm:$0xff]
    %v561 = vld [vmem:[%s5 + $0x50] sm:$0xff]
    %v562 = vld [vmem:[%s5 + $0x58] sm:$0xff]
    %v563 = vld [vmem:[%s5 + $0x60] sm:$0xff]
    %v564 = vld [vmem:[%s5 + $0x68] sm:$0xff]
    %v565 = vld [vmem:[%s5 + $0x70] sm:$0xff]
    %v566 = vld [vmem:[%s5 + $0x78] sm:$0xff]
    %568 = vset.pattern.permute.xlu0 0
    %569 = vperm.xlu0 %568, %v67
    %v570 = vpop.permute.xlu0 %569
    %573 = vset.pattern.permute.xlu0 0
    %574 = vperm.xlu0 %573, %v68
    %v575 = vpop.permute.xlu0 %574
    %578 = vset.pattern.permute.xlu0 0
    %579 = vperm.xlu0 %578, %v69
    %v580 = vpop.permute.xlu0 %579
    %583 = vset.pattern.permute.xlu0 0
    %584 = vperm.xlu0 %583, %v70
    %v585 = vpop.permute.xlu0 %584
    %588 = vset.pattern.permute.xlu0 0
    %589 = vperm.xlu0 %588, %v71
    %v590 = vpop.permute.xlu0 %589
    %593 = vset.pattern.permute.xlu0 0
    %594 = vperm.xlu0 %593, %v72
    %v595 = vpop.permute.xlu0 %594
    %598 = vset.pattern.permute.xlu0 0
    %599 = vperm.xlu0 %598, %v73
    %v600 = vpop.permute.xlu0 %599
    %603 = vset.pattern.permute.xlu0 0
    %604 = vperm.xlu0 %603, %v74
    %v605 = vpop.permute.xlu0 %604
    %608 = vset.pattern.permute.xlu0 0
    %609 = vperm.xlu0 %608, %v75
    %v610 = vpop.permute.xlu0 %609
    %613 = vset.pattern.permute.xlu0 0
    %614 = vperm.xlu0 %613, %v76
    %v615 = vpop.permute.xlu0 %614
    %618 = vset.pattern.permute.xlu0 0
    %619 = vperm.xlu0 %618, %v77
    %v620 = vpop.permute.xlu0 %619
    %623 = vset.pattern.permute.xlu0 0
    %624 = vperm.xlu0 %623, %v78
    %v625 = vpop.permute.xlu0 %624
    %628 = vset.pattern.permute.xlu0 0
    %629 = vperm.xlu0 %628, %v79
    %v630 = vpop.permute.xlu0 %629
    %633 = vset.pattern.permute.xlu0 0
    %634 = vperm.xlu0 %633, %v80
    %v635 = vpop.permute.xlu0 %634
    %638 = vset.pattern.permute.xlu0 0
    %639 = vperm.xlu0 %638, %v81
    %v640 = vpop.permute.xlu0 %639
    %643 = vset.pattern.permute.xlu0 0
    %644 = vperm.xlu0 %643, %v82
    %v645 = vpop.permute.xlu0 %644
    %647 = vmatpush.msra.mxu0 %v550
    %648 = vmatpush.msra.mxu0 %v549
    %649 = vmatpush.msra.mxu0 %v548
    %650 = vmatpush.msra.mxu0 %v547
    %651 = vmatpush.msra.mxu0 %v546
    %652 = vmatpush.msra.mxu0 %v545
    %653 = vmatpush.msra.mxu0 %v544
    %654 = vmatpush.msra.mxu0 %v543
    %655 = vmatpush.msra.mxu0 %v542
    %656 = vmatpush.msra.mxu0 %v541
    %657 = vmatpush.msra.mxu0 %v540
    %658 = vmatpush.msra.mxu0 %v539
    %659 = vmatpush.msra.mxu0 %v538
    %660 = vmatpush.msra.mxu0 %v537
    %661 = vmatpush.msra.mxu0 %v536
    %662 = vmatpush.msra.mxu0 %v535
    %663 = vmatmul.f32.gmra.mxu0 %v551
    %v664 = vpop.f32.mrf.mxu0
    %v665 = vadd.f32 %v570, %v664
    %666 = vmatmul.f32.gmra.mxu0 %v552
    %v667 = vpop.f32.mrf.mxu0
    %v668 = vadd.f32 %v575, %v667
    %669 = vmatmul.f32.gmra.mxu0 %v553
    %v670 = vpop.f32.mrf.mxu0
    %v671 = vadd.f32 %v580, %v670
    %672 = vmatmul.f32.gmra.mxu0 %v554
    %v673 = vpop.f32.mrf.mxu0
    %v674 = vadd.f32 %v585, %v673
    %675 = vmatmul.f32.gmra.mxu0 %v555
    %v676 = vpop.f32.mrf.mxu0
    %v677 = vadd.f32 %v590, %v676
    %678 = vmatmul.f32.gmra.mxu0 %v556
    %v679 = vpop.f32.mrf.mxu0
    %v680 = vadd.f32 %v595, %v679
    %681 = vmatmul.f32.gmra.mxu0 %v557
    %v682 = vpop.f32.mrf.mxu0
    %v683 = vadd.f32 %v600, %v682
    %684 = vmatmul.f32.gmra.mxu0 %v558
    %v685 = vpop.f32.mrf.mxu0
    %v686 = vadd.f32 %v605, %v685
    %687 = vmatmul.f32.gmra.mxu0 %v559
    %v688 = vpop.f32.mrf.mxu0
    %v689 = vadd.f32 %v610, %v688
    %690 = vmatmul.f32.gmra.mxu0 %v560
    %v691 = vpop.f32.mrf.mxu0
    %v692 = vadd.f32 %v615, %v691
    %693 = vmatmul.f32.gmra.mxu0 %v561
    %v694 = vpop.f32.mrf.mxu0
    %v695 = vadd.f32 %v620, %v694
    %696 = vmatmul.f32.gmra.mxu0 %v562
    %v697 = vpop.f32.mrf.mxu0
    %v698 = vadd.f32 %v625, %v697
    %699 = vmatmul.f32.gmra.mxu0 %v563
    %v700 = vpop.f32.mrf.mxu0
    %v701 = vadd.f32 %v630, %v700
    %702 = vmatmul.f32.gmra.mxu0 %v564
    %v703 = vpop.f32.mrf.mxu0
    %v704 = vadd.f32 %v635, %v703
    %705 = vmatmul.f32.gmra.mxu0 %v565
    %v706 = vpop.f32.mrf.mxu0
    %v707 = vadd.f32 %v640, %v706
    %708 = vmatmul.f32.gmra.mxu0 %v566
    %v709 = vpop.f32.mrf.mxu0
    %v710 = vadd.f32 %v645, %v709
    %711 = vdwg.mxu0
    %v712 = vmax.f32 %v665, 0.0
    %v713 = vmax.f32 %v668, 0.0
    %v714 = vmax.f32 %v671, 0.0
    %v715 = vmax.f32 %v674, 0.0
    %v716 = vmax.f32 %v677, 0.0
    %v717 = vmax.f32 %v680, 0.0
    %v718 = vmax.f32 %v683, 0.0
    %v719 = vmax.f32 %v686, 0.0
    %v720 = vmax.f32 %v689, 0.0
    %v721 = vmax.f32 %v692, 0.0
    %v722 = vmax.f32 %v695, 0.0
    %v723 = vmax.f32 %v698, 0.0
    %v724 = vmax.f32 %v701, 0.0
    %v725 = vmax.f32 %v704, 0.0
    %v726 = vmax.f32 %v707, 0.0
    %v727 = vmax.f32 %v710, 0.0
    %v728 = vld [vmem:[%s7] sm:$0x1]
    %730 = vset.pattern.permute.xlu0 0
    %731 = vperm.xlu0 %730, %v83
    %v732 = vpop.permute.xlu0 %731
    %v734 = vperm.slane %v732, 0
    %735 = vmatpush.msra.mxu0 %v727
    %736 = vmatpush.msra.mxu0 %v726
    %737 = vmatpush.msra.mxu0 %v725
    %738 = vmatpush.msra.mxu0 %v724
    %739 = vmatpush.msra.mxu0 %v723
    %740 = vmatpush.msra.mxu0 %v722
    %741 = vmatpush.msra.mxu0 %v721
    %742 = vmatpush.msra.mxu0 %v720
    %743 = vmatpush.msra.mxu0 %v719
    %744 = vmatpush.msra.mxu0 %v718
    %745 = vmatpush.msra.mxu0 %v717
    %746 = vmatpush.msra.mxu0 %v716
    %747 = vmatpush.msra.mxu0 %v715
    %748 = vmatpush.msra.mxu0 %v714
    %749 = vmatpush.msra.mxu0 %v713
    %750 = vmatpush.msra.mxu0 %v712
    %751 = vmatmul.f32.gmra.mxu0 %v728
    %v752 = vpop.f32.mrf.mxu0
    %v753 = vadd.f32 %v734, %v752
    %754 = vdwg.mxu0
    %755 = vst [vmem:[#allocation3] sm:$0x1] %v753
    // Predicated region
    $region38: #{tpu_custom_call.1} parent=1 // pred_check
      _
    $region39: #{tpu_custom_call.1} parent=1 // pred_check_branch
      %757 = sbr.rel (0) target = $region41
    $region40: #{tpu_custom_call.1} parent=1 // pred_region
      %759 = vsyncadd [#allocation4], 0
      %s761 = sshll.u32 [#allocation3], 4
      %s762 = int_to_ptr.vmem [resolvable:$true] %s761
      %s763 = sshll.u32 %s9, 4
      %s764 = int_to_ptr.hbm [resolvable:$true] %s763
      %766 = dma.vmem_to_hbm [thread:$0]  %s762, 16, %s764, [#allocation4]
    $region41: #{tpu_custom_call.1} parent=1 // pred_fallthru
      _
    // Predicated region
    $region42: #{tpu_custom_call.1} parent=1 // pred_check
      _
    $region43: #{tpu_custom_call.1} parent=1 // pred_check_branch
      %768 = sbr.rel (0) target = $region45
    $region44: #{tpu_custom_call.1} parent=1 // pred_region
      %770 = dma.done [#allocation4], 16
    $region45: #{tpu_custom_call.1} parent=1 // pred_fallthru
      _
    %771 = vsyncpa [#allocation4], 1

</llo_original>
